<compile_context>
chip_gen: v5e
topology: v5e:2x2
jax: 0.10.0
libtpu: 0.0.40
codegen_flags: <defaults>
</compile_context>

<pallas_src>
import functools

import jax
import jax.numpy as jnp
from jax import lax
from jax.experimental import pallas as pl
from jax.experimental.pallas import tpu as pltpu

KSIZE = 7
PAD = 3


def _spatial_attn_kernel(b_ref, x_ref, ma_ref, mm_ref, o_ref, *, c_chunk):
    # b_ref:  (1,)        f32 SMEM — conv bias
    # x_ref:  (nb, C, HW)     VMEM — block of nb images, spatial dims flattened
    # ma_ref: (HW, HW)    f32 VMEM — conv matrix for the channel-mean map
    # mm_ref: (HW, HW)    f32 VMEM — conv matrix for the channel-max map
    # o_ref:  (nb, 1, HW) f32 VMEM — lane-dense attention-map block
    nb, C, HW = x_ref.shape

    def stats(xc):                                    # xc: (nb, k, HW)
        xc = xc.astype(jnp.float32)                   # bf16-friendly upcast
        return jnp.sum(xc, axis=1), jnp.max(xc, axis=1)

    n_full, rem = divmod(C, c_chunk)
    s = jnp.zeros((nb, HW), jnp.float32)
    mx = jnp.full((nb, HW), -jnp.inf, jnp.float32)

    if n_full <= 8:
        # Small channel count: fully static slices (zero-cost views).
        for t in range(n_full):
            cs, cm = stats(x_ref[:, t * c_chunk:(t + 1) * c_chunk, :])
            s, mx = s + cs, jnp.maximum(mx, cm)
    else:
        # Large C: rolled loop keeps vreg pressure flat as block_n grows.
        def body(t, carry):
            acc_s, acc_m = carry
            c0 = pl.multiple_of(t * c_chunk, c_chunk)
            cs, cm = stats(x_ref[:, pl.ds(c0, c_chunk), :])
            return acc_s + cs, jnp.maximum(acc_m, cm)

        s, mx = lax.fori_loop(0, n_full, body, (s, mx))
    if rem:
        cs, cm = stats(x_ref[:, n_full * c_chunk:, :])
        s, mx = s + cs, jnp.maximum(mx, cm)

    avg = s * jnp.float32(1.0 / C)                    # (nb, HW)

    # 7x7 SAME conv over the two maps == two MXU matmuls against the
    # precomputed conv matrices (masks + weights already baked in).
    acc = (jnp.dot(avg, ma_ref[...], preferred_element_type=jnp.float32)
           + jnp.dot(mx, mm_ref[...], preferred_element_type=jnp.float32)
           + b_ref[0])

    o_ref[...] = jax.nn.sigmoid(acc)[:, None, :]


def _build_conv_matrices(weight, H, W):
    """Bake the Conv2d(2,1,7,pad=3) weights + SAME-padding zeros into two
    (HW, HW) matrices so that conv(cat([avg,max])) == avg @ M_avg + max @ M_max."""
    HW = H * W
    w = weight.reshape(2, KSIZE, KSIZE).astype(jnp.float32)
    ii = jnp.arange(H, dtype=jnp.int32)[:, None]      # output pixel row
    jj = jnp.arange(W, dtype=jnp.int32)[None, :]      # output pixel col
    p_out = (ii * W + jj).reshape(-1)                 # (HW,)
    mats = []
    for c in range(2):
        m = jnp.zeros((HW, HW), jnp.float32)
        for ki in range(KSIZE):
            for kj in range(KSIZE):
                di, dj = ki - PAD, kj - PAD
                si, sj = ii + di, jj + dj
                valid = ((si >= 0) & (si < H) & (sj >= 0) & (sj < W)).reshape(-1)
                p_in = (jnp.clip(si, 0, H - 1) * W
                        + jnp.clip(sj, 0, W - 1)).reshape(-1)
                vals = jnp.where(valid, w[c, ki, kj], 0.0)
                m = m.at[p_in, p_out].add(vals)
        mats.append(m)
    return mats[0], mats[1]


def spatial_attention(x, weight, bias, *, block_n=32):
    """x: (N, C, H, W); weight: (1, 2, 7, 7); bias: (1,). Returns (N, 1, H, W) f32."""
    N, C, H, W = x.shape
    HW = H * W

    m_avg, m_max = _build_conv_matrices(weight, H, W)
    b = bias.reshape(-1).astype(jnp.float32)

    # --- batch blocking ------------------------------------------------------
    nb = max(1, min(block_n, N))
    if N >= 2:
        # Make sure the "parallel" batch axis has >= 2 steps so v7x's two
        # TensorCores both get work, even for tiny batches.
        nb = min(nb, pl.cdiv(N, 2))

    itemsize = jnp.dtype(x.dtype).itemsize

    def vmem_bytes(nb_):
        x_blk = nb_ * C * HW * itemsize
        m_blk = 2 * HW * HW * 4
        o_blk = nb_ * HW * 4
        return 2 * (x_blk + m_blk + o_blk)            # double-buffered

    budget = 48 << 20                                 # headroom under v7x's 64 MiB
    while nb > 1 and vmem_bytes(nb) > budget:
        nb = max(1, nb // 2)

    ng = pl.cdiv(N, nb)
    n_pad = ng * nb

    xf = x.reshape(N, C, HW)                          # free, lane-dense layout
    if n_pad != N:
        xf = jnp.pad(xf, ((0, n_pad - N), (0, 0), (0, 0)))

    c_chunk = min(C, 16)
    kernel = functools.partial(_spatial_attn_kernel, c_chunk=c_chunk)
    vmem_limit = int(min(max(vmem_bytes(nb) + (4 << 20), 16 << 20), 64 << 20))

    out = pl.pallas_call(
        kernel,
        out_shape=jax.ShapeDtypeStruct((n_pad, 1, HW), jnp.float32),
        grid=(ng,),
        in_specs=[
            pl.BlockSpec(memory_space=pltpu.MemorySpace.SMEM),   # bias
            pl.BlockSpec((nb, C, HW), lambda n: (n, 0, 0)),      # x block
            pl.BlockSpec((HW, HW), lambda n: (0, 0)),            # conv matrix (avg)
            pl.BlockSpec((HW, HW), lambda n: (0, 0)),            # conv matrix (max)
        ],
        out_specs=pl.BlockSpec((nb, 1, HW), lambda n: (n, 0, 0)),
        compiler_params=pltpu.CompilerParams(
            dimension_semantics=("parallel",),
            vmem_limit_bytes=vmem_limit),
    )(b, xf, m_avg, m_max)

    return out[:N].reshape(N, 1, H, W)


def _reference(x, weight, bias):
    avg = jnp.mean(x, axis=1, keepdims=True)
    mx = jnp.max(x, axis=1, keepdims=True)
    cat = jnp.concatenate([avg, mx], axis=1)
    conv = lax.conv_general_dilated(
        cat, weight, window_strides=(1, 1), padding="SAME",
        dimension_numbers=("NCHW", "OIHW", "NCHW"),
        precision=lax.Precision.HIGHEST)
    return jax.nn.sigmoid(conv + bias.reshape(1, 1, 1, 1))


if __name__ == "__main__":
    key = jax.random.PRNGKey(0)
    kx, kw, kb = jax.random.split(key, 3)

    N, C, H, W = 2, 4, 16, 16
    x = jax.random.normal(kx, (N, C, H, W), dtype=jnp.float32)

    # Deterministic Conv2d(2, 1, 7, padding=3) parameters (PyTorch-like uniform bound).
    fan_in = 2 * KSIZE * KSIZE
    bound = 1.0 / (fan_in ** 0.5)
    weight = jax.random.uniform(kw, (1, 2, KSIZE, KSIZE), jnp.float32,
                                minval=-bound, maxval=bound)
    bias = jax.random.uniform(kb, (1,), jnp.float32, minval=-bound, maxval=bound)

    # f32 path
    out = jax.block_until_ready(spatial_attention(x, weight, bias))
    ref = jax.block_until_ready(_reference(x, weight, bias))
    assert out.shape == (N, 1, H, W), out.shape
    err = float(jnp.max(jnp.abs(out - ref)))
    assert jnp.allclose(out, ref, atol=5e-3, rtol=5e-3), err

    # bf16-activation path (HBM-traffic win on the memory-bound path)
    x_bf16 = x.astype(jnp.bfloat16)
    out_bf = jax.block_until_ready(spatial_attention(x_bf16, weight, bias))
    ref_bf = jax.block_until_ready(
        _reference(x_bf16.astype(jnp.float32), weight, bias))
    err_bf = float(jnp.max(jnp.abs(out_bf - ref_bf)))
    assert jnp.allclose(out_bf, ref_bf, atol=5e-3, rtol=5e-3), err_bf

    print("KERNEL_OK")
</pallas_src>

<mosaic_0001>
module attributes {stable_mosaic.version = 11 : i64} {
  func.func @_spatial_attn_kernel(%arg0: i32, %arg1: memref<1xf32, #tpu.memory_space<smem>>, %arg2: memref<1x4x256xf32, #tpu.memory_space<vmem>>, %arg3: memref<256x256xf32, #tpu.memory_space<vmem>>, %arg4: memref<256x256xf32, #tpu.memory_space<vmem>>, %arg5: memref<1x1x256xf32, #tpu.memory_space<vmem>>) attributes {dimension_semantics = [#tpu.dimension_semantics<parallel>], iteration_bounds = array<i64: 2>, scalar_prefetch = 0 : i64, scratch_operands = 0 : i64, tpu.core_type = #tpu.core_type<tc>, window_params = [{transform_indices = @transform_0, window_bounds = array<i64: 1>}, {transform_indices = @transform_1, window_bounds = array<i64: 1, 4, 256>}, {pipeline_mode = #tpu.pipeline_mode<synchronous>, transform_indices = @transform_2, window_bounds = array<i64: 256, 256>}, {pipeline_mode = #tpu.pipeline_mode<synchronous>, transform_indices = @transform_3, window_bounds = array<i64: 256, 256>}, {transform_indices = @transform_4, window_bounds = array<i64: 1, 1, 256>}]} {
    %cst = arith.constant 0.000000e+00 : f32
    %0 = vector.broadcast %cst : f32 to vector<1x256xf32>
    %cst_0 = arith.constant 0xFF800000 : f32
    %1 = vector.broadcast %cst_0 : f32 to vector<1x256xf32>
    %c0 = arith.constant 0 : index
    %c0_1 = arith.constant 0 : index
    %c0_2 = arith.constant 0 : index
    %2 = vector.load %arg2[%c0, %c0_1, %c0_2] : memref<1x4x256xf32, #tpu.memory_space<vmem>>, vector<1x4x256xf32>
    %cst_3 = arith.constant dense<0.000000e+00> : vector<1x256xf32>
    %3 = vector.multi_reduction <add>, %2, %cst_3 [1] : vector<1x4x256xf32> to vector<1x256xf32>
    %cst_4 = arith.constant dense<0xFF800000> : vector<1x256xf32>
    %4 = vector.multi_reduction <maximumf>, %2, %cst_4 [1] : vector<1x4x256xf32> to vector<1x256xf32>
    %5 = arith.addf %0, %3 : vector<1x256xf32>
    %6 = arith.maximumf %1, %4 : vector<1x256xf32>
    %cst_5 = arith.constant 2.500000e-01 : f32
    %7 = vector.broadcast %cst_5 : f32 to vector<1x256xf32>
    %8 = arith.mulf %5, %7 : vector<1x256xf32>
    %c0_6 = arith.constant 0 : index
    %c0_7 = arith.constant 0 : index
    %9 = vector.load %arg3[%c0_6, %c0_7] : memref<256x256xf32, #tpu.memory_space<vmem>>, vector<256x256xf32>
    %cst_8 = arith.constant dense<0.000000e+00> : vector<1x256xf32>
    %10 = tpu.matmul %8, %9, %cst_8 {dimension_numbers = #tpu.dot_dimension_numbers<[1], [0], [0], [1], [0, 0, 1, 1], [], []>} : vector<1x256xf32>, vector<256x256xf32>, vector<1x256xf32> -> vector<1x256xf32>
    %c0_9 = arith.constant 0 : index
    %c0_10 = arith.constant 0 : index
    %11 = vector.load %arg4[%c0_9, %c0_10] : memref<256x256xf32, #tpu.memory_space<vmem>>, vector<256x256xf32>
    %cst_11 = arith.constant dense<0.000000e+00> : vector<1x256xf32>
    %12 = tpu.matmul %6, %11, %cst_11 {dimension_numbers = #tpu.dot_dimension_numbers<[1], [0], [0], [1], [0, 0, 1, 1], [], []>} : vector<1x256xf32>, vector<256x256xf32>, vector<1x256xf32> -> vector<1x256xf32>
    %13 = arith.addf %10, %12 : vector<1x256xf32>
    %c0_12 = arith.constant 0 : index
    %14 = memref.load %arg1[%c0_12] : memref<1xf32, #tpu.memory_space<smem>>
    %15 = vector.broadcast %14 : f32 to vector<1x256xf32>
    %16 = arith.addf %13, %15 : vector<1x256xf32>
    %17 = arith.negf %16 : vector<1x256xf32>
    %18 = math.exp %17 : vector<1x256xf32>
    %cst_13 = arith.constant 1.000000e+00 : f32
    %19 = vector.broadcast %cst_13 : f32 to vector<1x256xf32>
    %20 = arith.addf %19, %18 : vector<1x256xf32>
    %21 = arith.divf %19, %20 : vector<1x256xf32>
    %22 = vector.shape_cast %21 : vector<1x256xf32> to vector<1x1x256xf32>
    %c0_14 = arith.constant 0 : index
    %c0_15 = arith.constant 0 : index
    %c0_16 = arith.constant 0 : index
    %23 = vector.load %arg5[%c0_14, %c0_15, %c0_16] : memref<1x1x256xf32, #tpu.memory_space<vmem>>, vector<1x1x256xf32>
    tpu.vector_store %arg5[%c0_14, %c0_15, %c0_16], %22 {strides = array<i32>} : memref<1x1x256xf32, #tpu.memory_space<vmem>>, vector<1x1x256xf32>,
    return
  }
  func.func @transform_0(%arg0: i32) -> i32 {
    %c0_i32 = arith.constant 0 : i32
    %c0_i32_0 = arith.constant 0 : i32
    return %c0_i32 : i32
  }
  func.func @transform_1(%arg0: i32) -> (i32, i32, i32) {
    %c0_i32 = arith.constant 0 : i32
    %c0_i32_0 = arith.constant 0 : i32
    %c0_i32_1 = arith.constant 0 : i32
    return %arg0, %c0_i32, %c0_i32_0 : i32, i32, i32
  }
  func.func @transform_2(%arg0: i32) -> (i32, i32) {
    %c0_i32 = arith.constant 0 : i32
    %c0_i32_0 = arith.constant 0 : i32
    %c0_i32_1 = arith.constant 0 : i32
    return %c0_i32, %c0_i32_0 : i32, i32
  }
  func.func @transform_3(%arg0: i32) -> (i32, i32) {
    %c0_i32 = arith.constant 0 : i32
    %c0_i32_0 = arith.constant 0 : i32
    %c0_i32_1 = arith.constant 0 : i32
    return %c0_i32, %c0_i32_0 : i32, i32
  }
  func.func @transform_4(%arg0: i32) -> (i32, i32, i32) {
    %c0_i32 = arith.constant 0 : i32
    %c0_i32_0 = arith.constant 0 : i32
    %c0_i32_1 = arith.constant 0 : i32
    return %arg0, %c0_i32, %c0_i32_0 : i32, i32, i32
  }
}

</mosaic_0001>

<llo_original>
// kernel: tpu_custom_call.1
$region0: #{tpu_custom_call.1}
  #allocation0 [shape = 'u32[]', space=smem, size = 0x4, offset = 0x4, fixed_abs, tag = 'smem constant byte address 0x4 - core index']
  #allocation1 [shape = 'u32[72,128]{1,0:T(1,128)}', space=vmem, size = 0x9000, scoped, tag = 'internal scratch']
  #allocation2 [shape = 'f32[1]{0:T(128)S(6)}', space=smem, size = 0x200, scoped, tag = 'scoped memory for tpu_custom_call.1']
  %s0 = inlined_call_operand.<no memory space> [shape: f32[1], index: 0, kind: input, shape index: {}]
  %s1 = inlined_call_operand.hbm [shape: f32[2,4,256], index: 1, kind: input, shape index: {}]
  %s2 = inlined_call_operand.hbm [shape: f32[256,256], index: 2, kind: input, shape index: {}]
  %s3 = inlined_call_operand.hbm [shape: f32[256,256], index: 3, kind: input, shape index: {}]
  %s4 = inlined_call_operand.hbm [shape: f32[2,1,256], index: 4, kind: output, shape index: {}]
  %s5 = sld [smem:[#allocation0]]
  $region61: #{tpu_custom_call.1} parent=0
    _
  %s7 = ssub.s32 1, %s5
  %s8 = scalar_select 0, %s7, %s5
  %9 = sst [smem:[#allocation2]] %s0
  $region1: #{tpu_custom_call.1} parent=0
    #allocation3 [shape = 'u8[8192]{0}', space=vmem, size = 0x2000, scoped, tag = 'input window, operand 1']
    #allocation4 [shape = 's32[2]{0}', space=sflag, size = 0x8, scoped, tag = 'scoped memory for tpu_custom_call.1']
    #allocation5 [shape = 's32[2]{0}', space=sflag, size = 0x8, scoped, tag = 'scoped memory for tpu_custom_call.1']
    #allocation6 [shape = 'u8[262144]{0}', space=vmem, size = 0x40000, scoped, tag = 'input window, operand 2, single buffered']
    #allocation7 [shape = 's32[1]{0}', space=sflag, size = 0x4, scoped, tag = 'scoped memory for tpu_custom_call.1']
    #allocation8 [shape = 'u8[262144]{0}', space=vmem, size = 0x40000, scoped, tag = 'input window, operand 3, single buffered']
    #allocation9 [shape = 'u8[2048]{0}', space=vmem, size = 0x800, scoped, tag = 'output window, operand 0']
    %10 = vsyncpa [#allocation4], 0
    %s11 = scalar_lea.sflag [#allocation4], 1
    %12 = vsyncpa %s11, 0
    %13 = vsyncpa [#allocation7], 0
    %14 = vsyncpa [#allocation5], 0
    %s15 = scalar_lea.sflag [#allocation5], 1
    %16 = vsyncpa %s15, 0
    loop: start=0, step=1, limit=4
    $region2: #{tpu_custom_call.1} parent=1 // loop_pre_header
      _
    $region3: #{tpu_custom_call.1} parent=1 // loop_header
      %s18 = sphi 0, %s22
      %p19 = scmp.ge.s32.totalorder %s18, 4
      %s26 = sphi 0, %s26
      %s28 = sphi 0, %s26
      %s29 = sphi 0, %s28
      %s43 = sphi 0, %s29
      %s49 = sphi 0, %s51
      %s52 = sphi 0, %s49
      %s53 = sphi 0, %s52
      %s69 = sphi 0, %s53
      %s73 = sphi 0, %s73
      %s75 = sphi 0, %s73
      %s76 = sphi 0, %s75
      %s90 = sphi 0, %s76
      %s94 = sphi 0, %s94
      %s96 = sphi 0, %s94
      %s97 = sphi 0, %s96
      %s111 = sphi 0, %s97
      %s117 = sphi 0, %s119
      %s120 = sphi 0, %s117
      %s121 = sphi 0, %s120
      %s137 = sphi 0, %s121
    $region4: #{tpu_custom_call.1} parent=1 // loop_header_branch
      %21 = sbr.rel (%p19) target = $region8
    $region5: #{tpu_custom_call.1} parent=1 // loop_body
      %s23 = ssub.s32 %s18, 1
      %s24 = ssub.s32 %s18, 2
      %s25 = sadd.s32 %s18, 1
      %s27 = sadd.s32 %s26, 1
      %p30 = scmp.eq.s32.totalorder %s18, 1
      %p31 = scmp.ne.s32.totalorder %s26, %s28
      %p32 = scmp.eq.s32.totalorder %s18, 0
      %p33 = por %p31, %p32
      %p34 = scmp.ne.s32.totalorder %s26, %s28
      %p35 = scmp.eq.s32.totalorder %s23, 1
      %p36 = por %p34, %p35
      %p37 = scmp.ne.s32.totalorder %s28, %s29
      %p38 = scmp.eq.s32.totalorder %s23, 0
      %p39 = por %p37, %p38
      %p40 = scmp.ne.s32.totalorder %s28, %s29
      %p41 = scmp.eq.s32.totalorder %s24, 1
      %p42 = por %p40, %p41
      %p44 = scmp.ne.s32.totalorder %s29, %s43
      %p45 = scmp.eq.s32.totalorder %s24, 0
      %p46 = por %p44, %p45
      %s47 = ssub.s32 %s18, %s25
      %p48 = scmp.eq.s32.totalorder %s47, 0
      %s50 = sadd.s32 %s49, 1
      %s51 = scalar_select %p48, %s49, %s50
      %p54 = pneg %p48
      %p55 = scmp.eq.s32.totalorder %s18, 1
      %p56 = por %p54, %p55
      %p57 = scmp.ne.s32.totalorder %s49, %s52
      %p58 = scmp.eq.s32.totalorder %s18, 0
      %p59 = por %p57, %p58
      %p60 = scmp.ne.s32.totalorder %s49, %s52
      %p61 = scmp.eq.s32.totalorder %s23, 1
      %p62 = por %p60, %p61
      %p63 = scmp.ne.s32.totalorder %s52, %s53
      %p64 = scmp.eq.s32.totalorder %s23, 0
      %p65 = por %p63, %p64
      %p66 = scmp.ne.s32.totalorder %s52, %s53
      %p67 = scmp.eq.s32.totalorder %s24, 1
      %p68 = por %p66, %p67
      %p70 = scmp.ne.s32.totalorder %s53, %s69
      %p71 = scmp.eq.s32.totalorder %s24, 0
      %p72 = por %p70, %p71
      %s74 = sadd.s32 %s73, 1
      %p77 = scmp.eq.s32.totalorder %s18, 1
      %p78 = scmp.ne.s32.totalorder %s73, %s75
      %p79 = scmp.eq.s32.totalorder %s18, 0
      %p80 = por %p78, %p79
      %p81 = scmp.ne.s32.totalorder %s73, %s75
      %p82 = scmp.eq.s32.totalorder %s23, 1
      %p83 = por %p81, %p82
      %p84 = scmp.ne.s32.totalorder %s75, %s76
      %p85 = scmp.eq.s32.totalorder %s23, 0
      %p86 = por %p84, %p85
      %p87 = scmp.ne.s32.totalorder %s75, %s76
      %p88 = scmp.eq.s32.totalorder %s24, 1
      %p89 = por %p87, %p88
      %p91 = scmp.ne.s32.totalorder %s76, %s90
      %p92 = scmp.eq.s32.totalorder %s24, 0
      %p93 = por %p91, %p92
      %s95 = sadd.s32 %s94, 1
      %p98 = scmp.eq.s32.totalorder %s18, 1
      %p99 = scmp.ne.s32.totalorder %s94, %s96
      %p100 = scmp.eq.s32.totalorder %s18, 0
      %p101 = por %p99, %p100
      %p102 = scmp.ne.s32.totalorder %s94, %s96
      %p103 = scmp.eq.s32.totalorder %s23, 1
      %p104 = por %p102, %p103
      %p105 = scmp.ne.s32.totalorder %s96, %s97
      %p106 = scmp.eq.s32.totalorder %s23, 0
      %p107 = por %p105, %p106
      %p108 = scmp.ne.s32.totalorder %s96, %s97
      %p109 = scmp.eq.s32.totalorder %s24, 1
      %p110 = por %p108, %p109
      %p112 = scmp.ne.s32.totalorder %s97, %s111
      %p113 = scmp.eq.s32.totalorder %s24, 0
      %p114 = por %p112, %p113
      %s115 = ssub.s32 %s18, %s25
      %p116 = scmp.eq.s32.totalorder %s115, 0
      %s118 = sadd.s32 %s117, 1
      %s119 = scalar_select %p116, %s117, %s118
      %p122 = pneg %p116
      %p123 = scmp.eq.s32.totalorder %s18, 1
      %p124 = por %p122, %p123
      %p125 = scmp.ne.s32.totalorder %s117, %s120
      %p126 = scmp.eq.s32.totalorder %s18, 0
      %p127 = por %p125, %p126
      %p128 = scmp.ne.s32.totalorder %s117, %s120
      %p129 = scmp.eq.s32.totalorder %s23, 1
      %p130 = por %p128, %p129
      %p131 = scmp.ne.s32.totalorder %s120, %s121
      %p132 = scmp.eq.s32.totalorder %s23, 0
      %p133 = por %p131, %p132
      %p134 = scmp.ne.s32.totalorder %s120, %s121
      %p135 = scmp.eq.s32.totalorder %s24, 1
      %p136 = por %p134, %p135
      %p138 = scmp.ne.s32.totalorder %s121, %s137
      %p139 = scmp.eq.s32.totalorder %s24, 0
      %p140 = por %p138, %p139
      %p141 = scmp.le.s32.totalorder 1, %s18
      %p142 = scmp.lt.s32.totalorder %s18, 3
      %p143 = pnand %p141, %p142
      %p144 = pneg %p143
      // Predicated region
      $region9: #{tpu_custom_call.1} parent=5 // pred_check
        _
      $region10: #{tpu_custom_call.1} parent=5 // pred_check_branch
        %146 = sbr.rel (%p143) target = $region12
      $region11: #{tpu_custom_call.1} parent=5 // pred_region
        %s147 = ssub.s32 %s18, 1
        // Predicated region
        $region13: #{tpu_custom_call.1} parent=11 // pred_check
          %p148 = pneg %p39
        $region14: #{tpu_custom_call.1} parent=11 // pred_check_branch
          %150 = sbr.rel (%p148) target = $region16
        $region15: #{tpu_custom_call.1} parent=11 // pred_region
          _
        $region16: #{tpu_custom_call.1} parent=11 // pred_fallthru
          _
        // Predicated region
        $region17: #{tpu_custom_call.1} parent=11 // pred_check
          %p151 = pneg %p86
        $region18: #{tpu_custom_call.1} parent=11 // pred_check_branch
          %153 = sbr.rel (%p151) target = $region20
        $region19: #{tpu_custom_call.1} parent=11 // pred_region
          %155 = vsyncadd [#allocation7], 0
          %s156 = sshll.u32 %s2, 4
          %s157 = int_to_ptr.hbm [resolvable:$true] %s156
          %s158 = sshll.u32 [#allocation6], 4
          %s159 = int_to_ptr.vmem [resolvable:$true] %s158
          %164 = dma.hbm_to_vmem [thread:$0]  %s157, 8192, %s159, [#allocation7], 256, 256, 16
        $region20: #{tpu_custom_call.1} parent=11 // pred_fallthru
          _
        // Predicated region
        $region21: #{tpu_custom_call.1} parent=11 // pred_check
          %p165 = pneg %p107
        $region22: #{tpu_custom_call.1} parent=11 // pred_check_branch
          %167 = sbr.rel (%p165) target = $region24
        $region23: #{tpu_custom_call.1} parent=11 // pred_region
          %169 = vsyncadd [#allocation7], 0
          %s170 = sshll.u32 %s3, 4
          %s171 = int_to_ptr.hbm [resolvable:$true] %s170
          %s172 = sshll.u32 [#allocation8], 4
          %s173 = int_to_ptr.vmem [resolvable:$true] %s172
          %178 = dma.hbm_to_vmem [thread:$0]  %s171, 8192, %s173, [#allocation7], 256, 256, 16
        $region24: #{tpu_custom_call.1} parent=11 // pred_fallthru
          _
      $region12: #{tpu_custom_call.1} parent=5 // pred_fallthru
        _
      %p179 = scmp.lt.s32.totalorder %s18, 2
      // Predicated region
      $region25: #{tpu_custom_call.1} parent=5 // pred_check
        %p180 = pneg %p179
      $region26: #{tpu_custom_call.1} parent=5 // pred_check_branch
        %182 = sbr.rel (%p180) target = $region28
      $region27: #{tpu_custom_call.1} parent=5 // pred_region
        // Predicated region
        $region29: #{tpu_custom_call.1} parent=27 // pred_check
          %p183 = pneg %p59
        $region30: #{tpu_custom_call.1} parent=27 // pred_check_branch
          %185 = sbr.rel (%p183) target = $region32
        $region31: #{tpu_custom_call.1} parent=27 // pred_region
          %s186 = sand.u32 %s49, 1
          %s187 = scalar_lea.sflag [#allocation4], %s186
          %s188 = sand.u32 %s49, 1
          %s189 = smul.addr %s188, 8
          %s190 = scalar_lea.vmem [#allocation3], %s189
          %192 = vsyncadd %s187, 0
          %s193 = smul.addr %s18, 2
          %s194 = smul.addr %s193, 4
          %s195 = scalar_lea.hbm %s1, %s194
          %s197 = sshll.u32 %s195, 4
          %s198 = int_to_ptr.hbm [resolvable:$true] %s197
          %s199 = sshll.u32 %s190, 4
          %s200 = int_to_ptr.vmem [resolvable:$true] %s199
          %202 = dma.hbm_to_vmem [thread:$0]  %s198, 128, %s200, %s187
        $region32: #{tpu_custom_call.1} parent=27 // pred_fallthru
          _
      $region28: #{tpu_custom_call.1} parent=5 // pred_fallthru
        _
      %p203 = scmp.le.s32.totalorder 1, %s18
      %p204 = scmp.lt.s32.totalorder %s18, 3
      %p205 = pnand %p203, %p204
      %p206 = pneg %p205
      // Predicated region
      $region33: #{tpu_custom_call.1} parent=5 // pred_check
        _
      $region34: #{tpu_custom_call.1} parent=5 // pred_check_branch
        %208 = sbr.rel (%p205) target = $region36
      $region35: #{tpu_custom_call.1} parent=5 // pred_region
        %s209 = ssub.s32 %s18, 1
        %s210 = sand.u32 %s52, 1
        %s211 = scalar_lea.sflag [#allocation4], %s210
        %s212 = sand.u32 %s52, 1
        %s213 = smul.addr %s212, 8
        %s214 = scalar_lea.vmem [#allocation3], %s213
        // Predicated region
        $region37: #{tpu_custom_call.1} parent=35 // pred_check
          %p215 = pneg %p65
        $region38: #{tpu_custom_call.1} parent=35 // pred_check_branch
          %217 = sbr.rel (%p215) target = $region40
        $region39: #{tpu_custom_call.1} parent=35 // pred_region
          %219 = dma.done %s211, 128
        $region40: #{tpu_custom_call.1} parent=35 // pred_fallthru
          _
        // Predicated region
        $region41: #{tpu_custom_call.1} parent=35 // pred_check
          %p220 = pneg %p86
        $region42: #{tpu_custom_call.1} parent=35 // pred_check_branch
          %222 = sbr.rel (%p220) target = $region44
        $region43: #{tpu_custom_call.1} parent=35 // pred_region
          %224 = dma.done [#allocation7], 8192
        $region44: #{tpu_custom_call.1} parent=35 // pred_fallthru
          _
        // Predicated region
        $region45: #{tpu_custom_call.1} parent=35 // pred_check
          %p225 = pneg %p107
        $region46: #{tpu_custom_call.1} parent=35 // pred_check_branch
          %227 = sbr.rel (%p225) target = $region48
        $region47: #{tpu_custom_call.1} parent=35 // pred_region
          %229 = dma.done [#allocation7], 8192
        $region48: #{tpu_custom_call.1} parent=35 // pred_fallthru
          _
        %p230 = pneg %p39
        %p231 = pneg %p36
        %s232 = sand.u32 %s52, 1
        %s233 = scalar_lea.sflag [#allocation4], %s232
        %s234 = sand.u32 %s52, 1
        %s235 = smul.addr %s234, 8
        %s236 = scalar_lea.vmem [#allocation3], %s235
        %p237 = pneg %p65
        %p238 = pneg %p62
        %p239 = pneg %p86
        %p240 = pneg %p83
        %p241 = pneg %p107
        %p242 = pneg %p104
        %p243 = pneg %p133
        %p244 = pneg %p130
        %s245 = sand.u32 %s120, 1
        %s246 = scalar_lea.sflag [#allocation5], %s245
        %s247 = sand.u32 %s120, 1
        %s248 = smul.addr %s247, 2
        %s249 = scalar_lea.vmem [#allocation9], %s248
        %v250 = vld [vmem:[%s214] sm:$0xff]
        %252 = vst [vmem:[#allocation1] ss:$2 sm:$0xff] %v250
        %v253 = vld.sshfl [vmem:[#allocation1] sm:$0xff pattern:$0x75316420]
        %v254 = vld.sshfl [vmem:[#allocation1 + $0x8] sm:$0xff pattern:$0x75316420]
        %vm257 = vcmask 1043456
        %v258 = vsel %vm257, %v253, 0.0
        %v259 = vrot.slane %v258, 4
        %v260 = vadd.f32 %v258, %v259
        %v261 = vrot.slane %v260, 2
        %v262 = vadd.f32 %v260, %v261
        %v263 = vrot.slane %v262, 1
        %v264 = vadd.f32 %v262, %v263
        %v265 = vsel %vm257, %v254, 0.0
        %v266 = vrot.slane %v265, 4
        %v267 = vadd.f32 %v265, %v266
        %v268 = vrot.slane %v267, 2
        %v269 = vadd.f32 %v267, %v268
        %v270 = vrot.slane %v269, 1
        %v271 = vadd.f32 %v269, %v270
        %272 = vst [vmem:[#allocation1] ss:$2 sm:$0xff] %v250
        %v273 = vld.sshfl [vmem:[#allocation1] sm:$0xff pattern:$0x75316420]
        %v274 = vld.sshfl [vmem:[#allocation1 + $0x8] sm:$0xff pattern:$0x75316420]
        %v277 = vsel %vm257, %v273, -inf
        %v278 = vrot.slane %v277, 4
        %v279 = vmax.f32 %v277, %v278
        %v280 = vrot.slane %v279, 2
        %v281 = vmax.f32 %v279, %v280
        %v282 = vrot.slane %v281, 1
        %v283 = vmax.f32 %v281, %v282
        %v284 = vsel %vm257, %v274, -inf
        %v285 = vrot.slane %v284, 4
        %v286 = vmax.f32 %v284, %v285
        %v287 = vrot.slane %v286, 2
        %v288 = vmax.f32 %v286, %v287
        %v289 = vrot.slane %v288, 1
        %v290 = vmax.f32 %v288, %v289
        %v291 = vadd.f32 %v264, 0.0
        %v292 = vadd.f32 %v271, 0.0
        %v293 = vmul.f32 %v291, 0.25
        %v294 = vmul.f32 %v292, 0.25
        %v295 = vld [vmem:[#allocation6] sm:$0xff]
        %v296 = vld [vmem:[#allocation6 + $0x8] sm:$0xff]
        %v297 = vld [vmem:[#allocation6 + $0x10] sm:$0xff]
        %v298 = vld [vmem:[#allocation6 + $0x18] sm:$0xff]
        %v299 = vld [vmem:[#allocation6 + $0x20] sm:$0xff]
        %v300 = vld [vmem:[#allocation6 + $0x28] sm:$0xff]
        %v301 = vld [vmem:[#allocation6 + $0x30] sm:$0xff]
        %v302 = vld [vmem:[#allocation6 + $0x38] sm:$0xff]
        %v303 = vld [vmem:[#allocation6 + $0x40] sm:$0xff]
        %v304 = vld [vmem:[#allocation6 + $0x48] sm:$0xff]
        %v305 = vld [vmem:[#allocation6 + $0x50] sm:$0xff]
        %v306 = vld [vmem:[#allocation6 + $0x58] sm:$0xff]
        %v307 = vld [vmem:[#allocation6 + $0x60] sm:$0xff]
        %v308 = vld [vmem:[#allocation6 + $0x68] sm:$0xff]
        %v309 = vld [vmem:[#allocation6 + $0x70] sm:$0xff]
        %v310 = vld [vmem:[#allocation6 + $0x78] sm:$0xff]
        %v311 = vld [vmem:[#allocation6 + $0x80] sm:$0xff]
        %v312 = vld [vmem:[#allocation6 + $0x88] sm:$0xff]
        %v313 = vld [vmem:[#allocation6 + $0x90] sm:$0xff]
        %v314 = vld [vmem:[#allocation6 + $0x98] sm:$0xff]
        %v315 = vld [vmem:[#allocation6 + $0xa0] sm:$0xff]
        %v316 = vld [vmem:[#allocation6 + $0xa8] sm:$0xff]
        %v317 = vld [vmem:[#allocation6 + $0xb0] sm:$0xff]
        %v318 = vld [vmem:[#allocation6 + $0xb8] sm:$0xff]
        %v319 = vld [vmem:[#allocation6 + $0xc0] sm:$0xff]
        %v320 = vld [vmem:[#allocation6 + $0xc8] sm:$0xff]
        %v321 = vld [vmem:[#allocation6 + $0xd0] sm:$0xff]
        %v322 = vld [vmem:[#allocation6 + $0xd8] sm:$0xff]
        %v323 = vld [vmem:[#allocation6 + $0xe0] sm:$0xff]
        %v324 = vld [vmem:[#allocation6 + $0xe8] sm:$0xff]
        %v325 = vld [vmem:[#allocation6 + $0xf0] sm:$0xff]
        %v326 = vld [vmem:[#allocation6 + $0xf8] sm:$0xff]
        %v327 = vld [vmem:[#allocation6 + $0x100] sm:$0xff]
        %v328 = vld [vmem:[#allocation6 + $0x108] sm:$0xff]
        %v329 = vld [vmem:[#allocation6 + $0x110] sm:$0xff]
        %v330 = vld [vmem:[#allocation6 + $0x118] sm:$0xff]
        %v331 = vld [vmem:[#allocation6 + $0x120] sm:$0xff]
        %v332 = vld [vmem:[#allocation6 + $0x128] sm:$0xff]
        %v333 = vld [vmem:[#allocation6 + $0x130] sm:$0xff]
        %v334 = vld [vmem:[#allocation6 + $0x138] sm:$0xff]
        %v335 = vld [vmem:[#allocation6 + $0x140] sm:$0xff]
        %v336 = vld [vmem:[#allocation6 + $0x148] sm:$0xff]
        %v337 = vld [vmem:[#allocation6 + $0x150] sm:$0xff]
        %v338 = vld [vmem:[#allocation6 + $0x158] sm:$0xff]
        %v339 = vld [vmem:[#allocation6 + $0x160] sm:$0xff]
        %v340 = vld [vmem:[#allocation6 + $0x168] sm:$0xff]
        %v341 = vld [vmem:[#allocation6 + $0x170] sm:$0xff]
        %v342 = vld [vmem:[#allocation6 + $0x178] sm:$0xff]
        %v343 = vld [vmem:[#allocation6 + $0x180] sm:$0xff]
        %v344 = vld [vmem:[#allocation6 + $0x188] sm:$0xff]
        %v345 = vld [vmem:[#allocation6 + $0x190] sm:$0xff]
        %v346 = vld [vmem:[#allocation6 + $0x198] sm:$0xff]
        %v347 = vld [vmem:[#allocation6 + $0x1a0] sm:$0xff]
        %v348 = vld [vmem:[#allocation6 + $0x1a8] sm:$0xff]
        %v349 = vld [vmem:[#allocation6 + $0x1b0] sm:$0xff]
        %v350 = vld [vmem:[#allocation6 + $0x1b8] sm:$0xff]
        %v351 = vld [vmem:[#allocation6 + $0x1c0] sm:$0xff]
        %v352 = vld [vmem:[#allocation6 + $0x1c8] sm:$0xff]
        %v353 = vld [vmem:[#allocation6 + $0x1d0] sm:$0xff]
        %v354 = vld [vmem:[#allocation6 + $0x1d8] sm:$0xff]
        %v355 = vld [vmem:[#allocation6 + $0x1e0] sm:$0xff]
        %v356 = vld [vmem:[#allocation6 + $0x1e8] sm:$0xff]
        %v357 = vld [vmem:[#allocation6 + $0x1f0] sm:$0xff]
        %v358 = vld [vmem:[#allocation6 + $0x1f8] sm:$0xff]
        %v359 = vld [vmem:[#allocation8] sm:$0xff]
        %v360 = vld [vmem:[#allocation8 + $0x8] sm:$0xff]
        %v361 = vld [vmem:[#allocation8 + $0x10] sm:$0xff]
        %v362 = vld [vmem:[#allocation8 + $0x18] sm:$0xff]
        %v363 = vld [vmem:[#allocation8 + $0x20] sm:$0xff]
        %v364 = vld [vmem:[#allocation8 + $0x28] sm:$0xff]
        %v365 = vld [vmem:[#allocation8 + $0x30] sm:$0xff]
        %v366 = vld [vmem:[#allocation8 + $0x38] sm:$0xff]
        %v367 = vld [vmem:[#allocation8 + $0x40] sm:$0xff]
        %v368 = vld [vmem:[#allocation8 + $0x48] sm:$0xff]
        %v369 = vld [vmem:[#allocation8 + $0x50] sm:$0xff]
        %v370 = vld [vmem:[#allocation8 + $0x58] sm:$0xff]
        %v371 = vld [vmem:[#allocation8 + $0x60] sm:$0xff]
        %v372 = vld [vmem:[#allocation8 + $0x68] sm:$0xff]
        %v373 = vld [vmem:[#allocation8 + $0x70] sm:$0xff]
        %v374 = vld [vmem:[#allocation8 + $0x78] sm:$0xff]
        %v375 = vld [vmem:[#allocation8 + $0x80] sm:$0xff]
        %v376 = vld [vmem:[#allocation8 + $0x88] sm:$0xff]
        %v377 = vld [vmem:[#allocation8 + $0x90] sm:$0xff]
        %v378 = vld [vmem:[#allocation8 + $0x98] sm:$0xff]
        %v379 = vld [vmem:[#allocation8 + $0xa0] sm:$0xff]
        %v380 = vld [vmem:[#allocation8 + $0xa8] sm:$0xff]
        %v381 = vld [vmem:[#allocation8 + $0xb0] sm:$0xff]
        %v382 = vld [vmem:[#allocation8 + $0xb8] sm:$0xff]
        %v383 = vld [vmem:[#allocation8 + $0xc0] sm:$0xff]
        %v384 = vld [vmem:[#allocation8 + $0xc8] sm:$0xff]
        %v385 = vld [vmem:[#allocation8 + $0xd0] sm:$0xff]
        %v386 = vld [vmem:[#allocation8 + $0xd8] sm:$0xff]
        %v387 = vld [vmem:[#allocation8 + $0xe0] sm:$0xff]
        %v388 = vld [vmem:[#allocation8 + $0xe8] sm:$0xff]
        %v389 = vld [vmem:[#allocation8 + $0xf0] sm:$0xff]
        %v390 = vld [vmem:[#allocation8 + $0xf8] sm:$0xff]
        %v391 = vld [vmem:[#allocation8 + $0x100] sm:$0xff]
        %v392 = vld [vmem:[#allocation8 + $0x108] sm:$0xff]
        %v393 = vld [vmem:[#allocation8 + $0x110] sm:$0xff]
        %v394 = vld [vmem:[#allocation8 + $0x118] sm:$0xff]
        %v395 = vld [vmem:[#allocation8 + $0x120] sm:$0xff]
        %v396 = vld [vmem:[#allocation8 + $0x128] sm:$0xff]
        %v397 = vld [vmem:[#allocation8 + $0x130] sm:$0xff]
        %v398 = vld [vmem:[#allocation8 + $0x138] sm:$0xff]
        %v399 = vld [vmem:[#allocation8 + $0x140] sm:$0xff]
        %v400 = vld [vmem:[#allocation8 + $0x148] sm:$0xff]
        %v401 = vld [vmem:[#allocation8 + $0x150] sm:$0xff]
        %v402 = vld [vmem:[#allocation8 + $0x158] sm:$0xff]
        %v403 = vld [vmem:[#allocation8 + $0x160] sm:$0xff]
        %v404 = vld [vmem:[#allocation8 + $0x168] sm:$0xff]
        %v405 = vld [vmem:[#allocation8 + $0x170] sm:$0xff]
        %v406 = vld [vmem:[#allocation8 + $0x178] sm:$0xff]
        %v407 = vld [vmem:[#allocation8 + $0x180] sm:$0xff]
        %v408 = vld [vmem:[#allocation8 + $0x188] sm:$0xff]
        %v409 = vld [vmem:[#allocation8 + $0x190] sm:$0xff]
        %v410 = vld [vmem:[#allocation8 + $0x198] sm:$0xff]
        %v411 = vld [vmem:[#allocation8 + $0x1a0] sm:$0xff]
        %v412 = vld [vmem:[#allocation8 + $0x1a8] sm:$0xff]
        %v413 = vld [vmem:[#allocation8 + $0x1b0] sm:$0xff]
        %v414 = vld [vmem:[#allocation8 + $0x1b8] sm:$0xff]
        %v415 = vld [vmem:[#allocation8 + $0x1c0] sm:$0xff]
        %v416 = vld [vmem:[#allocation8 + $0x1c8] sm:$0xff]
        %v417 = vld [vmem:[#allocation8 + $0x1d0] sm:$0xff]
        %v418 = vld [vmem:[#allocation8 + $0x1d8] sm:$0xff]
        %v419 = vld [vmem:[#allocation8 + $0x1e0] sm:$0xff]
        %v420 = vld [vmem:[#allocation8 + $0x1e8] sm:$0xff]
        %v421 = vld [vmem:[#allocation8 + $0x1f0] sm:$0xff]
        %v422 = vld [vmem:[#allocation8 + $0x1f8] sm:$0xff]
        %423 = vmatpush.msra.mxu0 %v389
        %424 = vmatpush.msra.mxu0 %v387
        %425 = vmatpush.msra.mxu0 %v385
        %426 = vmatpush.msra.mxu0 %v383
        %427 = vmatpush.msra.mxu0 %v381
        %428 = vmatpush.msra.mxu0 %v379
        %429 = vmatpush.msra.mxu0 %v377
        %430 = vmatpush.msra.mxu0 %v375
        %431 = vmatpush.msra.mxu0 %v373
        %432 = vmatpush.msra.mxu0 %v371
        %433 = vmatpush.msra.mxu0 %v369
        %434 = vmatpush.msra.mxu0 %v367
        %435 = vmatpush.msra.mxu0 %v365
        %436 = vmatpush.msra.mxu0 %v363
        %437 = vmatpush.msra.mxu0 %v361
        %438 = vmatpush.msra.mxu0 %v359
        %439 = vmatmul.f32.gmra.mxu0 %v283
        %v440 = vpop.f32.mrf.mxu0
        %v441 = vadd.f32 0.0, %v440
        %442 = vdwg.mxu0
        %443 = vmatpush.msra.mxu0 %v421
        %444 = vmatpush.msra.mxu0 %v419
        %445 = vmatpush.msra.mxu0 %v417
        %446 = vmatpush.msra.mxu0 %v415
        %447 = vmatpush.msra.mxu0 %v413
        %448 = vmatpush.msra.mxu0 %v411
        %449 = vmatpush.msra.mxu0 %v409
        %450 = vmatpush.msra.mxu0 %v407
        %451 = vmatpush.msra.mxu0 %v405
        %452 = vmatpush.msra.mxu0 %v403
        %453 = vmatpush.msra.mxu0 %v401
        %454 = vmatpush.msra.mxu0 %v399
        %455 = vmatpush.msra.mxu0 %v397
        %456 = vmatpush.msra.mxu0 %v395
        %457 = vmatpush.msra.mxu0 %v393
        %458 = vmatpush.msra.mxu0 %v391
        %459 = vmatmul.f32.gmra.mxu0 %v290
        %v460 = vpop.f32.mrf.mxu0
        %v461 = vadd.f32 %v441, %v460
        %462 = vdwg.mxu0
        %463 = vmatpush.msra.mxu0 %v390
        %464 = vmatpush.msra.mxu0 %v388
        %465 = vmatpush.msra.mxu0 %v386
        %466 = vmatpush.msra.mxu0 %v384
        %467 = vmatpush.msra.mxu0 %v382
        %468 = vmatpush.msra.mxu0 %v380
        %469 = vmatpush.msra.mxu0 %v378
        %470 = vmatpush.msra.mxu0 %v376
        %471 = vmatpush.msra.mxu0 %v374
        %472 = vmatpush.msra.mxu0 %v372
        %473 = vmatpush.msra.mxu0 %v370
        %474 = vmatpush.msra.mxu0 %v368
        %475 = vmatpush.msra.mxu0 %v366
        %476 = vmatpush.msra.mxu0 %v364
        %477 = vmatpush.msra.mxu0 %v362
        %478 = vmatpush.msra.mxu0 %v360
        %479 = vmatmul.f32.gmra.mxu0 %v283
        %v480 = vpop.f32.mrf.mxu0
        %v481 = vadd.f32 0.0, %v480
        %482 = vdwg.mxu0
        %483 = vmatpush.msra.mxu0 %v422
        %484 = vmatpush.msra.mxu0 %v420
        %485 = vmatpush.msra.mxu0 %v418
        %486 = vmatpush.msra.mxu0 %v416
        %487 = vmatpush.msra.mxu0 %v414
        %488 = vmatpush.msra.mxu0 %v412
        %489 = vmatpush.msra.mxu0 %v410
        %490 = vmatpush.msra.mxu0 %v408
        %491 = vmatpush.msra.mxu0 %v406
        %492 = vmatpush.msra.mxu0 %v404
        %493 = vmatpush.msra.mxu0 %v402
        %494 = vmatpush.msra.mxu0 %v400
        %495 = vmatpush.msra.mxu0 %v398
        %496 = vmatpush.msra.mxu0 %v396
        %497 = vmatpush.msra.mxu0 %v394
        %498 = vmatpush.msra.mxu0 %v392
        %499 = vmatmul.f32.gmra.mxu0 %v290
        %v500 = vpop.f32.mrf.mxu0
        %v501 = vadd.f32 %v481, %v500
        %502 = vdwg.mxu0
        %503 = vmatpush.msra.mxu0 %v325
        %504 = vmatpush.msra.mxu0 %v323
        %505 = vmatpush.msra.mxu0 %v321
        %506 = vmatpush.msra.mxu0 %v319
        %507 = vmatpush.msra.mxu0 %v317
        %508 = vmatpush.msra.mxu0 %v315
        %509 = vmatpush.msra.mxu0 %v313
        %510 = vmatpush.msra.mxu0 %v311
        %511 = vmatpush.msra.mxu0 %v309
        %512 = vmatpush.msra.mxu0 %v307
        %513 = vmatpush.msra.mxu0 %v305
        %514 = vmatpush.msra.mxu0 %v303
        %515 = vmatpush.msra.mxu0 %v301
        %516 = vmatpush.msra.mxu0 %v299
        %517 = vmatpush.msra.mxu0 %v297
        %518 = vmatpush.msra.mxu0 %v295
        %519 = vmatmul.f32.gmra.mxu0 %v293
        %v520 = vpop.f32.mrf.mxu0
        %v521 = vadd.f32 %v461, %v520
        %522 = vdwg.mxu0
        %523 = vmatpush.msra.mxu0 %v357
        %524 = vmatpush.msra.mxu0 %v355
        %525 = vmatpush.msra.mxu0 %v353
        %526 = vmatpush.msra.mxu0 %v351
        %527 = vmatpush.msra.mxu0 %v349
        %528 = vmatpush.msra.mxu0 %v347
        %529 = vmatpush.msra.mxu0 %v345
        %530 = vmatpush.msra.mxu0 %v343
        %531 = vmatpush.msra.mxu0 %v341
        %532 = vmatpush.msra.mxu0 %v339
        %533 = vmatpush.msra.mxu0 %v337
        %534 = vmatpush.msra.mxu0 %v335
        %535 = vmatpush.msra.mxu0 %v333
        %536 = vmatpush.msra.mxu0 %v331
        %537 = vmatpush.msra.mxu0 %v329
        %538 = vmatpush.msra.mxu0 %v327
        %539 = vmatmul.f32.gmra.mxu0 %v294
        %v540 = vpop.f32.mrf.mxu0
        %v541 = vadd.f32 %v521, %v540
        %542 = vdwg.mxu0
        %543 = vmatpush.msra.mxu0 %v326
        %544 = vmatpush.msra.mxu0 %v324
        %545 = vmatpush.msra.mxu0 %v322
        %546 = vmatpush.msra.mxu0 %v320
        %547 = vmatpush.msra.mxu0 %v318
        %548 = vmatpush.msra.mxu0 %v316
        %549 = vmatpush.msra.mxu0 %v314
        %550 = vmatpush.msra.mxu0 %v312
        %551 = vmatpush.msra.mxu0 %v310
        %552 = vmatpush.msra.mxu0 %v308
        %553 = vmatpush.msra.mxu0 %v306
        %554 = vmatpush.msra.mxu0 %v304
        %555 = vmatpush.msra.mxu0 %v302
        %556 = vmatpush.msra.mxu0 %v300
        %557 = vmatpush.msra.mxu0 %v298
        %558 = vmatpush.msra.mxu0 %v296
        %559 = vmatmul.f32.gmra.mxu0 %v293
        %v560 = vpop.f32.mrf.mxu0
        %v561 = vadd.f32 %v501, %v560
        %562 = vdwg.mxu0
        %563 = vmatpush.msra.mxu0 %v358
        %564 = vmatpush.msra.mxu0 %v356
        %565 = vmatpush.msra.mxu0 %v354
        %566 = vmatpush.msra.mxu0 %v352
        %567 = vmatpush.msra.mxu0 %v350
        %568 = vmatpush.msra.mxu0 %v348
        %569 = vmatpush.msra.mxu0 %v346
        %570 = vmatpush.msra.mxu0 %v344
        %571 = vmatpush.msra.mxu0 %v342
        %572 = vmatpush.msra.mxu0 %v340
        %573 = vmatpush.msra.mxu0 %v338
        %574 = vmatpush.msra.mxu0 %v336
        %575 = vmatpush.msra.mxu0 %v334
        %576 = vmatpush.msra.mxu0 %v332
        %577 = vmatpush.msra.mxu0 %v330
        %578 = vmatpush.msra.mxu0 %v328
        %579 = vmatmul.f32.gmra.mxu0 %v294
        %v580 = vpop.f32.mrf.mxu0
        %v581 = vadd.f32 %v561, %v580
        %582 = vdwg.mxu0
        %s583 = sld [smem:[#allocation2]]
        %v584 = vstv %s583
        %v585 = vadd.f32 %v541, %v584
        %v586 = vadd.f32 %v581, %v584
        %v587 = vxor.u32 %v585, 2147483648
        %v588 = vxor.u32 %v586, 2147483648
        %v589 = vmul.f32 %v587, 1.442695
        %v590 = vpow.pop %v589
        %v591 = vmul.f32 %v588, 1.442695
        %v592 = vpow.pop %v591
        %v593 = vadd.f32 %v590, 1.0
        %v594 = vadd.f32 %v592, 1.0
        %v595 = vrcp.pop %v593
        %v596 = vmul.f32 %v593, %v595
        %v597 = vsub.f32 1.0, %v596
        %v598 = vmul.f32 %v595, %v597
        %v599 = vadd.f32 %v595, %v598
        %vm600 = vweird.f32 %v593
        %vm601 = vweird.f32 %v595
        %vm602 = vmor %vm600, %vm601
        %v603 = vsel %vm602, %v595, %v599
        %v604 = vand.u32 2147483647, %v593
        %vm605 = vcmp.eq.f32.partialorder %v604, 8.507059e+37
        %v606 = vand.u32 %v593, 2147483648
        %v607 = vor.u32 1.1754944e-38, %v606
        %v608 = vsel %vm605, %v607, %v603
        %v609 = vmul.f32 1.0, %v608
        %v610 = vrcp.pop %v594
        %v611 = vmul.f32 %v594, %v610
        %v612 = vsub.f32 1.0, %v611
        %v613 = vmul.f32 %v610, %v612
        %v614 = vadd.f32 %v610, %v613
        %vm615 = vweird.f32 %v594
        %vm616 = vweird.f32 %v610
        %vm617 = vmor %vm615, %vm616
        %v618 = vsel %vm617, %v610, %v614
        %v619 = vand.u32 2147483647, %v594
        %vm620 = vcmp.eq.f32.partialorder %v619, 8.507059e+37
        %v621 = vand.u32 %v594, 2147483648
        %v622 = vor.u32 1.1754944e-38, %v621
        %v623 = vsel %vm620, %v622, %v618
        %v624 = vmul.f32 1.0, %v623
        %v627 = vrot.slane %v624, 7
        %vm628 = vcmask 1040384
        %v629 = vsel %vm628, %v609, %v627
        %v631 = vlaneseq
        %vm632 = vcmp.ge.s32.totalorder %v631, 0
        %vm633 = vcmp.lt.s32.totalorder %v631, 256
        %vm634 = vmand %vm632, %vm633
        %635 = vst.msk [vmem:[%s249] sm:$0x3] %vm634, %v629
        %s636 = sand.u32 %s120, 1
        %s637 = scalar_lea.sflag [#allocation5], %s636
        %s638 = sand.u32 %s120, 1
        %s639 = smul.addr %s638, 2
        %s640 = scalar_lea.vmem [#allocation9], %s639
        // Predicated region
        $region49: #{tpu_custom_call.1} parent=35 // pred_check
          %p641 = pneg %p130
        $region50: #{tpu_custom_call.1} parent=35 // pred_check_branch
          %643 = sbr.rel (%p641) target = $region52
        $region51: #{tpu_custom_call.1} parent=35 // pred_region
          %645 = vsyncadd %s637, 0
          %s646 = smul.addr %s23, 2
          %s647 = scalar_lea.hbm %s4, %s646
          %s649 = sshll.u32 %s640, 4
          %s650 = int_to_ptr.vmem [resolvable:$true] %s649
          %s651 = sshll.u32 %s647, 4
          %s652 = int_to_ptr.hbm [resolvable:$true] %s651
          %654 = dma.vmem_to_hbm [thread:$0]  %s650, 32, %s652, %s637
        $region52: #{tpu_custom_call.1} parent=35 // pred_fallthru
          _
      $region36: #{tpu_custom_call.1} parent=5 // pred_fallthru
        _
      %p655 = scmp.le.s32.totalorder 2, %s18
      // Predicated region
      $region53: #{tpu_custom_call.1} parent=5 // pred_check
        %p656 = pneg %p655
      $region54: #{tpu_custom_call.1} parent=5 // pred_check_branch
        %658 = sbr.rel (%p656) target = $region56
      $region55: #{tpu_custom_call.1} parent=5 // pred_region
        %s659 = ssub.s32 %s18, 2
        // Predicated region
        $region57: #{tpu_custom_call.1} parent=55 // pred_check
          %p660 = pneg %p136
        $region58: #{tpu_custom_call.1} parent=55 // pred_check_branch
          %662 = sbr.rel (%p660) target = $region60
        $region59: #{tpu_custom_call.1} parent=55 // pred_region
          %s663 = sand.u32 %s121, 1
          %s664 = scalar_lea.sflag [#allocation5], %s663
          %s665 = sand.u32 %s121, 1
          %s666 = smul.addr %s665, 2
          %s667 = scalar_lea.vmem [#allocation9], %s666
          %669 = dma.done %s664, 32
        $region60: #{tpu_custom_call.1} parent=55 // pred_fallthru
          _
      $region56: #{tpu_custom_call.1} parent=5 // pred_fallthru
        _
    $region6: #{tpu_custom_call.1} parent=1 // loop_footer
      %s22 = sadd.s32 1, %s18
    $region7: #{tpu_custom_call.1} parent=1 // loop_footer_branch
      %17 = sbr.rel target = $region3
    $region8: #{tpu_custom_call.1} parent=1 // loop_exit
      _
    %670 = vsyncpa [#allocation4], 1
    %s671 = scalar_lea.sflag [#allocation4], 1
    %672 = vsyncpa %s671, 1
    %673 = vsyncpa [#allocation7], 1
    %674 = vsyncpa [#allocation5], 1
    %s675 = scalar_lea.sflag [#allocation5], 1
    %676 = vsyncpa %s675, 1

</llo_original>
